<compile_context>
chip_gen: v5e
topology: v5e:2x2
jax: 0.10.0
libtpu: 0.0.40
codegen_flags: <defaults>
</compile_context>

<pallas_src>
import functools

import jax
import jax.numpy as jnp
from jax.experimental import pallas as pl
from jax.experimental.pallas import tpu as pltpu


def _round_up(n, m):
    return ((n + m - 1) // m) * m


@functools.lru_cache(maxsize=1)
def _guess_num_tensorcores():
    """Best-effort TensorCores-per-device (v7x/v4/v5p: 2, v5e/v6e: 1)."""
    try:
        info = pltpu.get_tpu_info()
        for name in ("num_cores", "core_count", "num_tensorcores",
                     "tensorcores_per_chip"):
            v = getattr(info, name, None)
            if isinstance(v, int) and v > 0:
                return v
    except Exception:
        pass
    try:
        kind = jax.devices()[0].device_kind.lower()
        if ("v4" in kind) or ("v5p" in kind) or ("7" in kind):
            return 2
    except Exception:
        pass
    return 1


def _choose_block(B, block_b, num_cores):
    """Pick the per-grid-step batch tile (rows)."""
    if B <= 8:
        return 8
    blk = min(block_b, _round_up(B, 8))
    # Keep the 128-row sub-block fast path engaged whenever possible (avoids the
    # pathological sub=blk regime with huge f32 h1/h2 temporaries).
    blk = _round_up(blk, 128) if blk >= 128 else _round_up(blk, 8)
    # On multi-TensorCore chips (v7x) make sure both cores get a grid step, as
    # long as each step stays reasonably large.
    if num_cores > 1 and pl.cdiv(B, blk) < num_cores and B >= 256:
        blk = _round_up(pl.cdiv(B, num_cores), 128)
    return blk


def _expression_net_kernel(x_ref, w1_ref, b1_ref, w2_ref, b2_ref,
                           w3_ref, b3_ref, o_ref, *, n_sub, sub):
    def body(i, carry):
        r0 = pl.multiple_of(i * sub, sub)
        # f32 -> bf16 cast on the VPU (free once the kernel is HBM-bound).
        xs = x_ref[pl.ds(r0, sub), :].astype(jnp.bfloat16)
        # Weights / biases are read from VMEM refs inside each iteration so
        # their vreg live ranges never span the whole (unrolled) loop.
        # Layer 1: Linear(128 -> 256) + ReLU   (bf16 inputs, f32 MXU accumulate)
        h1 = jnp.dot(xs, w1_ref[...], preferred_element_type=jnp.float32)
        h1 = jnp.maximum(h1 + b1_ref[...], 0.0).astype(jnp.bfloat16)
        # Layer 2: Linear(256 -> 256) + ReLU
        h2 = jnp.dot(h1, w2_ref[...], preferred_element_type=jnp.float32)
        h2 = jnp.maximum(h2 + b2_ref[...], 0.0).astype(jnp.bfloat16)
        # Layer 3: Linear(256 -> 128 lane-padded; true width 52) + Tanh
        h3 = jnp.dot(h2, w3_ref[...], preferred_element_type=jnp.float32)
        o_ref[pl.ds(r0, sub), :] = jnp.tanh(h3 + b3_ref[...]).astype(o_ref.dtype)
        return carry

    if n_sub == 1:
        body(0, 0)
    else:
        jax.lax.fori_loop(0, n_sub, body, 0, unroll=2)


def prepare_params(params):
    """One-time weight prep (outside the hot path).

    Casts weights to bf16, biases to f32, and zero-pads layer 3 from 52 to 128
    output lanes so the kernel's store path is full-width / unmasked.
    """
    w1, b1, w2, b2, w3, b3 = params
    d_out = w3.shape[1]
    d_out_pad = _round_up(d_out, 128)
    w3p = jnp.pad(w3, ((0, 0), (0, d_out_pad - d_out)))
    b3p = jnp.pad(b3, ((0, 0), (0, d_out_pad - d_out)))
    return (w1.astype(jnp.bfloat16), b1.astype(jnp.float32),
            w2.astype(jnp.bfloat16), b2.astype(jnp.float32),
            w3p.astype(jnp.bfloat16), b3p.astype(jnp.float32))


@functools.partial(jax.jit, static_argnames=("block_b", "out_dtype"))
def expression_net_forward(x, prepared_params, block_b=2048,
                           out_dtype=jnp.bfloat16):
    """Fused MLP forward.

    x: [B, 128] float32.
    Returns the LANE-PADDED output [B, 128] in `out_dtype` (columns 52..127 are
    exactly zero).  Consumers should slice [:, :52]; returning the padded slab
    avoids an extra full read+write of the output at the kernel boundary.
    """
    w1, b1, w2, b2, w3, b3 = prepared_params
    B, D_in = x.shape
    H1 = w1.shape[1]
    H2 = w2.shape[1]
    D_out_pad = w3.shape[1]

    num_cores = _guess_num_tensorcores()
    blk = _choose_block(B, block_b, num_cores)
    grid = (pl.cdiv(B, blk),)

    # 128-row sub-blocks inside the tile keep h1/h2 temporaries small.
    sub = 128 if blk % 128 == 0 else blk
    n_sub = blk // sub

    kernel = functools.partial(_expression_net_kernel, n_sub=n_sub, sub=sub)

    return pl.pallas_call(
        kernel,
        out_shape=jax.ShapeDtypeStruct((B, D_out_pad), out_dtype),
        grid_spec=pltpu.PrefetchScalarGridSpec(
            num_scalar_prefetch=0,
            grid=grid,
            in_specs=[
                # activations: tile the batch axis; stays f32 until in-kernel cast
                pl.BlockSpec((blk, D_in), lambda i: (i, 0)),
                # weights / biases: full arrays, same block every grid step
                # (DMA'd once, resident in VMEM, ~0.25 MiB in bf16)
                pl.BlockSpec((D_in, H1), lambda i: (0, 0)),
                pl.BlockSpec((1, H1), lambda i: (0, 0)),
                pl.BlockSpec((H1, H2), lambda i: (0, 0)),
                pl.BlockSpec((1, H2), lambda i: (0, 0)),
                pl.BlockSpec((H2, D_out_pad), lambda i: (0, 0)),
                pl.BlockSpec((1, D_out_pad), lambda i: (0, 0)),
            ],
            out_specs=pl.BlockSpec((blk, D_out_pad), lambda i: (i, 0)),
        ),
        compiler_params=pltpu.CompilerParams(
            dimension_semantics=("parallel",)),
    )(x, w1, b1, w2, b2, w3, b3)


def init_params(key):
    """Deterministic init mimicking PyTorch nn.Linear's U(-1/sqrt(fan_in), ...).

    Weights are returned in [in_features, out_features] layout (already
    transposed relative to PyTorch's [out, in] convention), so y = x @ W + b.
    """
    def linear(key, fan_in, fan_out):
        kw, kb = jax.random.split(key)
        bound = 1.0 / jnp.sqrt(fan_in)
        w = jax.random.uniform(kw, (fan_in, fan_out), jnp.float32, -bound, bound)
        b = jax.random.uniform(kb, (1, fan_out), jnp.float32, -bound, bound)
        return w, b

    k1, k2, k3 = jax.random.split(key, 3)
    w1, b1 = linear(k1, 128, 256)
    w2, b2 = linear(k2, 256, 256)
    w3, b3 = linear(k3, 256, 52)
    return (w1, b1, w2, b2, w3, b3)


def reference_forward_f32(x, params):
    """Pure-JAX f32 reference (matches the PyTorch module exactly)."""
    w1, b1, w2, b2, w3, b3 = params
    h1 = jnp.maximum(x @ w1 + b1, 0.0)
    h2 = jnp.maximum(h1 @ w2 + b2, 0.0)
    return jnp.tanh(h2 @ w3 + b3)


def reference_forward_bf16(x, params):
    """Pure-JAX reference with the same bf16-in / f32-accumulate arithmetic."""
    w1, b1, w2, b2, w3, b3 = params
    f32 = jnp.float32
    xb = x.astype(jnp.bfloat16)
    h1 = jnp.maximum(
        jnp.dot(xb, w1.astype(jnp.bfloat16), preferred_element_type=f32) + b1, 0.0)
    h1 = h1.astype(jnp.bfloat16)
    h2 = jnp.maximum(
        jnp.dot(h1, w2.astype(jnp.bfloat16), preferred_element_type=f32) + b2, 0.0)
    h2 = h2.astype(jnp.bfloat16)
    return jnp.tanh(
        jnp.dot(h2, w3.astype(jnp.bfloat16), preferred_element_type=f32) + b3)


if __name__ == "__main__":
    key = jax.random.PRNGKey(0)
    k_params, k_x1, k_x2 = jax.random.split(key, 3)

    params = init_params(k_params)
    prep = prepare_params(params)

    D_OUT = 52

    # Small batch: exercises the partial (boundary) batch block, grid of 1.
    x_small = jax.random.normal(k_x1, (20, 128), dtype=jnp.float32)
    out_small_p = jax.block_until_ready(expression_net_forward(x_small, prep))
    assert out_small_p.shape == (20, 128), out_small_p.shape
    assert bool(jnp.all(out_small_p[:, D_OUT:] == 0)), "padded lanes not zero"
    out_small = out_small_p[:, :D_OUT].astype(jnp.float32)
    assert jnp.allclose(out_small, reference_forward_bf16(x_small, params),
                        atol=8e-3, rtol=0), "mismatch vs bf16 reference (small)"
    assert jnp.allclose(out_small, reference_forward_f32(x_small, params),
                        atol=3e-2, rtol=0), "mismatch vs f32 reference (small)"

    # Larger batch: exercises the 128-row sub-block loop (and, on v7x, the
    # two-TensorCore grid split).
    x_big = jax.random.normal(k_x2, (1024, 128), dtype=jnp.float32)
    out_big_p = jax.block_until_ready(expression_net_forward(x_big, prep))
    assert out_big_p.shape == (1024, 128), out_big_p.shape
    out_big = out_big_p[:, :D_OUT].astype(jnp.float32)
    assert jnp.allclose(out_big, reference_forward_bf16(x_big, params),
                        atol=8e-3, rtol=0), "mismatch vs bf16 reference (big)"
    assert jnp.allclose(out_big, reference_forward_f32(x_big, params),
                        atol=3e-2, rtol=0), "mismatch vs f32 reference (big)"

    print("KERNEL_OK")
</pallas_src>

<mosaic_0001>
module attributes {stable_mosaic.version = 11 : i64} {
  func.func @_expression_net_kernel(%arg0: i32, %arg1: memref<24x128xf32, #tpu.memory_space<vmem>>, %arg2: memref<128x256xbf16, #tpu.memory_space<vmem>>, %arg3: memref<1x256xf32, #tpu.memory_space<vmem>>, %arg4: memref<256x256xbf16, #tpu.memory_space<vmem>>, %arg5: memref<1x256xf32, #tpu.memory_space<vmem>>, %arg6: memref<256x128xbf16, #tpu.memory_space<vmem>>, %arg7: memref<1x128xf32, #tpu.memory_space<vmem>>, %arg8: memref<24x128xbf16, #tpu.memory_space<vmem>>) attributes {dimension_semantics = [#tpu.dimension_semantics<parallel>], iteration_bounds = array<i64: 1>, scalar_prefetch = 0 : i64, scratch_operands = 0 : i64, tpu.core_type = #tpu.core_type<tc>, window_params = [{transform_indices = @transform_0, window_bounds = array<i64: 24, 128>}, {pipeline_mode = #tpu.pipeline_mode<synchronous>, transform_indices = @transform_1, window_bounds = array<i64: 128, 256>}, {pipeline_mode = #tpu.pipeline_mode<synchronous>, transform_indices = @transform_2, window_bounds = array<i64: 1, 256>}, {pipeline_mode = #tpu.pipeline_mode<synchronous>, transform_indices = @transform_3, window_bounds = array<i64: 256, 256>}, {pipeline_mode = #tpu.pipeline_mode<synchronous>, transform_indices = @transform_4, window_bounds = array<i64: 1, 256>}, {pipeline_mode = #tpu.pipeline_mode<synchronous>, transform_indices = @transform_5, window_bounds = array<i64: 256, 128>}, {pipeline_mode = #tpu.pipeline_mode<synchronous>, transform_indices = @transform_6, window_bounds = array<i64: 1, 128>}, {transform_indices = @transform_7, window_bounds = array<i64: 24, 128>}]} {
    %c0_i32 = arith.constant 0 : i32
    %0 = tpu.assume_multiple %c0_i32, 24 : i32
    %1 = arith.index_cast %0 : i32 to index
    %c0 = arith.constant 0 : index
    %2 = vector.load %arg1[%1, %c0] : memref<24x128xf32, #tpu.memory_space<vmem>>, vector<24x128xf32>
    %3 = arith.truncf %2 : vector<24x128xf32> to vector<24x128xbf16>
    %c0_0 = arith.constant 0 : index
    %c0_1 = arith.constant 0 : index
    %4 = vector.load %arg2[%c0_0, %c0_1] : memref<128x256xbf16, #tpu.memory_space<vmem>>, vector<128x256xbf16>
    %cst = arith.constant dense<0.000000e+00> : vector<24x256xf32>
    %5 = tpu.matmul %3, %4, %cst {dimension_numbers = #tpu.dot_dimension_numbers<[1], [0], [0], [1], [0, 0, 1, 1], [], []>} : vector<24x128xbf16>, vector<128x256xbf16>, vector<24x256xf32> -> vector<24x256xf32>
    %c0_2 = arith.constant 0 : index
    %c0_3 = arith.constant 0 : index
    %6 = vector.load %arg3[%c0_2, %c0_3] : memref<1x256xf32, #tpu.memory_space<vmem>>, vector<1x256xf32>
    %7 = vector.broadcast %6 : vector<1x256xf32> to vector<24x256xf32>
    %8 = arith.addf %5, %7 : vector<24x256xf32>
    %cst_4 = arith.constant 0.000000e+00 : f32
    %9 = vector.broadcast %cst_4 : f32 to vector<24x256xf32>
    %10 = arith.maximumf %8, %9 : vector<24x256xf32>
    %11 = arith.truncf %10 : vector<24x256xf32> to vector<24x256xbf16>
    %c0_5 = arith.constant 0 : index
    %c0_6 = arith.constant 0 : index
    %12 = vector.load %arg4[%c0_5, %c0_6] : memref<256x256xbf16, #tpu.memory_space<vmem>>, vector<256x256xbf16>
    %cst_7 = arith.constant dense<0.000000e+00> : vector<24x256xf32>
    %13 = tpu.matmul %11, %12, %cst_7 {dimension_numbers = #tpu.dot_dimension_numbers<[1], [0], [0], [1], [0, 0, 1, 1], [], []>} : vector<24x256xbf16>, vector<256x256xbf16>, vector<24x256xf32> -> vector<24x256xf32>
    %c0_8 = arith.constant 0 : index
    %c0_9 = arith.constant 0 : index
    %14 = vector.load %arg5[%c0_8, %c0_9] : memref<1x256xf32, #tpu.memory_space<vmem>>, vector<1x256xf32>
    %15 = vector.broadcast %14 : vector<1x256xf32> to vector<24x256xf32>
    %16 = arith.addf %13, %15 : vector<24x256xf32>
    %cst_10 = arith.constant 0.000000e+00 : f32
    %17 = vector.broadcast %cst_10 : f32 to vector<24x256xf32>
    %18 = arith.maximumf %16, %17 : vector<24x256xf32>
    %19 = arith.truncf %18 : vector<24x256xf32> to vector<24x256xbf16>
    %c0_11 = arith.constant 0 : index
    %c0_12 = arith.constant 0 : index
    %20 = vector.load %arg6[%c0_11, %c0_12] : memref<256x128xbf16, #tpu.memory_space<vmem>>, vector<256x128xbf16>
    %cst_13 = arith.constant dense<0.000000e+00> : vector<24x128xf32>
    %21 = tpu.matmul %19, %20, %cst_13 {dimension_numbers = #tpu.dot_dimension_numbers<[1], [0], [0], [1], [0, 0, 1, 1], [], []>} : vector<24x256xbf16>, vector<256x128xbf16>, vector<24x128xf32> -> vector<24x128xf32>
    %c0_14 = arith.constant 0 : index
    %c0_15 = arith.constant 0 : index
    %22 = vector.load %arg7[%c0_14, %c0_15] : memref<1x128xf32, #tpu.memory_space<vmem>>, vector<1x128xf32>
    %23 = vector.broadcast %22 : vector<1x128xf32> to vector<24x128xf32>
    %24 = arith.addf %21, %23 : vector<24x128xf32>
    %25 = math.tanh %24 : vector<24x128xf32>
    %26 = arith.truncf %25 : vector<24x128xf32> to vector<24x128xbf16>
    %27 = arith.index_cast %0 : i32 to index
    %c0_16 = arith.constant 0 : index
    %28 = vector.load %arg8[%27, %c0_16] : memref<24x128xbf16, #tpu.memory_space<vmem>>, vector<24x128xbf16>
    tpu.vector_store %arg8[%27, %c0_16], %26 {strides = array<i32>} : memref<24x128xbf16, #tpu.memory_space<vmem>>, vector<24x128xbf16>,
    return
  }
  func.func @transform_0(%arg0: i32) -> (i32, i32) {
    %c0_i32 = arith.constant 0 : i32
    %c0_i32_0 = arith.constant 0 : i32
    return %arg0, %c0_i32 : i32, i32
  }
  func.func @transform_1(%arg0: i32) -> (i32, i32) {
    %c0_i32 = arith.constant 0 : i32
    %c0_i32_0 = arith.constant 0 : i32
    %c0_i32_1 = arith.constant 0 : i32
    return %c0_i32, %c0_i32_0 : i32, i32
  }
  func.func @transform_2(%arg0: i32) -> (i32, i32) {
    %c0_i32 = arith.constant 0 : i32
    %c0_i32_0 = arith.constant 0 : i32
    %c0_i32_1 = arith.constant 0 : i32
    return %c0_i32, %c0_i32_0 : i32, i32
  }
  func.func @transform_3(%arg0: i32) -> (i32, i32) {
    %c0_i32 = arith.constant 0 : i32
    %c0_i32_0 = arith.constant 0 : i32
    %c0_i32_1 = arith.constant 0 : i32
    return %c0_i32, %c0_i32_0 : i32, i32
  }
  func.func @transform_4(%arg0: i32) -> (i32, i32) {
    %c0_i32 = arith.constant 0 : i32
    %c0_i32_0 = arith.constant 0 : i32
    %c0_i32_1 = arith.constant 0 : i32
    return %c0_i32, %c0_i32_0 : i32, i32
  }
  func.func @transform_5(%arg0: i32) -> (i32, i32) {
    %c0_i32 = arith.constant 0 : i32
    %c0_i32_0 = arith.constant 0 : i32
    %c0_i32_1 = arith.constant 0 : i32
    return %c0_i32, %c0_i32_0 : i32, i32
  }
  func.func @transform_6(%arg0: i32) -> (i32, i32) {
    %c0_i32 = arith.constant 0 : i32
    %c0_i32_0 = arith.constant 0 : i32
    %c0_i32_1 = arith.constant 0 : i32
    return %c0_i32, %c0_i32_0 : i32, i32
  }
  func.func @transform_7(%arg0: i32) -> (i32, i32) {
    %c0_i32 = arith.constant 0 : i32
    %c0_i32_0 = arith.constant 0 : i32
    return %arg0, %c0_i32 : i32, i32
  }
}

</mosaic_0001>

<llo_original>
// kernel: expression_net_forward.1
$region0: #{expression_net_forward.1}
  #allocation0 [shape = 'u32[]', space=smem, size = 0x4, offset = 0x4, fixed_abs, tag = 'smem constant byte address 0x4 - core index']
  #allocation1 [shape = 'u32[72,128]{1,0:T(1,128)}', space=vmem, size = 0x9000, scoped, tag = 'internal scratch']
  %s0 = inlined_call_operand.hbm [shape: f32[20,128], index: 0, kind: input, shape index: {}]
  %s1 = inlined_call_operand.hbm [shape: bf16[128,256], index: 1, kind: input, shape index: {}]
  %s2 = inlined_call_operand.hbm [shape: f32[1,256], index: 2, kind: input, shape index: {}]
  %s3 = inlined_call_operand.hbm [shape: bf16[256,256], index: 3, kind: input, shape index: {}]
  %s4 = inlined_call_operand.vmem [shape: f32[1,256], index: 4, kind: input, shape index: {}]
  %s5 = inlined_call_operand.hbm [shape: bf16[256,128], index: 5, kind: input, shape index: {}]
  %s6 = inlined_call_operand.vmem [shape: f32[1,128], index: 6, kind: input, shape index: {}]
  %s7 = inlined_call_operand.hbm [shape: bf16[20,128], index: 7, kind: output, shape index: {}]
  %s8 = sld [smem:[#allocation0]]
  $region58: #{expression_net_forward.1} parent=0
    _
  %s10 = ssub.s32 1, %s8
  %s11 = scalar_select 0, %s10, %s8
  $region1: #{expression_net_forward.1} parent=0
    #allocation2 [shape = 'u8[12288]{0}', space=vmem, size = 0x3000, scoped, tag = 'input window, operand 0, single buffered']
    #allocation3 [shape = 's32[1]{0}', space=sflag, size = 0x4, scoped, tag = 'scoped memory for expression_net_forward.1']
    #allocation4 [shape = 's32[1]{0}', space=sflag, size = 0x4, scoped, tag = 'scoped memory for expression_net_forward.1']
    #allocation5 [shape = 'u8[65536]{0}', space=vmem, size = 0x10000, scoped, tag = 'input window, operand 1, single buffered']
    #allocation6 [shape = 's32[1]{0}', space=sflag, size = 0x4, scoped, tag = 'scoped memory for expression_net_forward.1']
    #allocation7 [shape = 'u8[1024]{0}', space=vmem, size = 0x400, scoped, tag = 'input window, operand 2, single buffered']
    #allocation8 [shape = 'u8[131072]{0}', space=vmem, size = 0x20000, scoped, tag = 'input window, operand 3, single buffered']
    #allocation9 [shape = 's32[1]{0}', space=sflag, size = 0x4, scoped, tag = 'scoped memory for expression_net_forward.1']
    #allocation10 [shape = 'u8[65536]{0}', space=vmem, size = 0x10000, scoped, tag = 'input window, operand 5, single buffered']
    #allocation11 [shape = 'u8[6144]{0}', space=vmem, size = 0x1800, scoped, tag = 'output window, operand 0, single buffered']
    %12 = vsyncpa [#allocation3], 0
    %13 = vsyncpa [#allocation6], 0
    %14 = vsyncpa [#allocation9], 0
    %15 = vsyncpa [#allocation4], 0
    // Predicated region
    $region2: #{expression_net_forward.1} parent=1 // pred_check
      _
    $region3: #{expression_net_forward.1} parent=1 // pred_check_branch
      %17 = sbr.rel (0) target = $region5
    $region4: #{expression_net_forward.1} parent=1 // pred_region
      %19 = vsyncadd [#allocation3], 0
      %s20 = sshll.u32 %s0, 4
      %s21 = int_to_ptr.hbm [resolvable:$true] %s20
      %s22 = sshll.u32 [#allocation2], 4
      %s23 = int_to_ptr.vmem [resolvable:$true] %s22
      %28 = dma.hbm_to_vmem [thread:$0]  %s21, 384, %s23, [#allocation3], 128, 128, 8
    $region5: #{expression_net_forward.1} parent=1 // pred_fallthru
      _
    // Predicated region
    $region6: #{expression_net_forward.1} parent=1 // pred_check
      _
    $region7: #{expression_net_forward.1} parent=1 // pred_check_branch
      %30 = sbr.rel (0) target = $region9
    $region8: #{expression_net_forward.1} parent=1 // pred_region
      %32 = vsyncadd [#allocation6], 0
      %s33 = sshll.u32 %s1, 4
      %s34 = int_to_ptr.hbm [resolvable:$true] %s33
      %s35 = sshll.u32 [#allocation5], 4
      %s36 = int_to_ptr.vmem [resolvable:$true] %s35
      %41 = dma.hbm_to_vmem [thread:$0]  %s34, 2048, %s36, [#allocation6], 128, 128, 8
    $region9: #{expression_net_forward.1} parent=1 // pred_fallthru
      _
    // Predicated region
    $region10: #{expression_net_forward.1} parent=1 // pred_check
      _
    $region11: #{expression_net_forward.1} parent=1 // pred_check_branch
      %43 = sbr.rel (0) target = $region13
    $region12: #{expression_net_forward.1} parent=1 // pred_region
      %45 = vsyncadd [#allocation6], 0
      %s47 = sshll.u32 %s2, 4
      %s48 = int_to_ptr.hbm [resolvable:$true] %s47
      %s49 = sshll.u32 [#allocation7], 4
      %s50 = int_to_ptr.vmem [resolvable:$true] %s49
      %52 = dma.hbm_to_vmem [thread:$0]  %s48, 32, %s50, [#allocation6]
    $region13: #{expression_net_forward.1} parent=1 // pred_fallthru
      _
    // Predicated region
    $region14: #{expression_net_forward.1} parent=1 // pred_check
      _
    $region15: #{expression_net_forward.1} parent=1 // pred_check_branch
      %54 = sbr.rel (0) target = $region17
    $region16: #{expression_net_forward.1} parent=1 // pred_region
      %56 = vsyncadd [#allocation9], 0
      %s57 = sshll.u32 %s3, 4
      %s58 = int_to_ptr.hbm [resolvable:$true] %s57
      %s59 = sshll.u32 [#allocation8], 4
      %s60 = int_to_ptr.vmem [resolvable:$true] %s59
      %65 = dma.hbm_to_vmem [thread:$0]  %s58, 4096, %s60, [#allocation9], 128, 128, 8
    $region17: #{expression_net_forward.1} parent=1 // pred_fallthru
      _
    // Predicated region
    $region18: #{expression_net_forward.1} parent=1 // pred_check
      _
    $region19: #{expression_net_forward.1} parent=1 // pred_check_branch
      %67 = sbr.rel (0) target = $region21
    $region20: #{expression_net_forward.1} parent=1 // pred_region
      _
    $region21: #{expression_net_forward.1} parent=1 // pred_fallthru
      _
    // Predicated region
    $region22: #{expression_net_forward.1} parent=1 // pred_check
      _
    $region23: #{expression_net_forward.1} parent=1 // pred_check_branch
      %69 = sbr.rel (0) target = $region25
    $region24: #{expression_net_forward.1} parent=1 // pred_region
      %71 = vsyncadd [#allocation9], 0
      %s72 = sshll.u32 %s5, 4
      %s73 = int_to_ptr.hbm [resolvable:$true] %s72
      %s74 = sshll.u32 [#allocation10], 4
      %s75 = int_to_ptr.vmem [resolvable:$true] %s74
      %80 = dma.hbm_to_vmem [thread:$0]  %s73, 2048, %s75, [#allocation9], 64, 64, 4
    $region25: #{expression_net_forward.1} parent=1 // pred_fallthru
      _
    // Predicated region
    $region26: #{expression_net_forward.1} parent=1 // pred_check
      _
    $region27: #{expression_net_forward.1} parent=1 // pred_check_branch
      %82 = sbr.rel (0) target = $region29
    $region28: #{expression_net_forward.1} parent=1 // pred_region
      _
    $region29: #{expression_net_forward.1} parent=1 // pred_fallthru
      _
    // Predicated region
    $region30: #{expression_net_forward.1} parent=1 // pred_check
      _
    $region31: #{expression_net_forward.1} parent=1 // pred_check_branch
      %84 = sbr.rel (0) target = $region33
    $region32: #{expression_net_forward.1} parent=1 // pred_region
      %86 = dma.done [#allocation3], 384
    $region33: #{expression_net_forward.1} parent=1 // pred_fallthru
      _
    // Predicated region
    $region34: #{expression_net_forward.1} parent=1 // pred_check
      _
    $region35: #{expression_net_forward.1} parent=1 // pred_check_branch
      %88 = sbr.rel (0) target = $region37
    $region36: #{expression_net_forward.1} parent=1 // pred_region
      %90 = dma.done [#allocation6], 2048
    $region37: #{expression_net_forward.1} parent=1 // pred_fallthru
      _
    // Predicated region
    $region38: #{expression_net_forward.1} parent=1 // pred_check
      _
    $region39: #{expression_net_forward.1} parent=1 // pred_check_branch
      %92 = sbr.rel (0) target = $region41
    $region40: #{expression_net_forward.1} parent=1 // pred_region
      %94 = dma.done [#allocation6], 32
    $region41: #{expression_net_forward.1} parent=1 // pred_fallthru
      _
    // Predicated region
    $region42: #{expression_net_forward.1} parent=1 // pred_check
      _
    $region43: #{expression_net_forward.1} parent=1 // pred_check_branch
      %96 = sbr.rel (0) target = $region45
    $region44: #{expression_net_forward.1} parent=1 // pred_region
      %98 = dma.done [#allocation9], 4096
    $region45: #{expression_net_forward.1} parent=1 // pred_fallthru
      _
    // Predicated region
    $region46: #{expression_net_forward.1} parent=1 // pred_check
      _
    $region47: #{expression_net_forward.1} parent=1 // pred_check_branch
      %100 = sbr.rel (0) target = $region49
    $region48: #{expression_net_forward.1} parent=1 // pred_region
      %102 = dma.done [#allocation9], 2048
    $region49: #{expression_net_forward.1} parent=1 // pred_fallthru
      _
    %v103 = vld [vmem:[#allocation2] sm:$0xff]
    %v104 = vld [vmem:[#allocation2 + $0x8] sm:$0xff]
    %v105 = vld [vmem:[#allocation2 + $0x10] sm:$0xff]
    %v106 = vpack.c.bf16 %v104, %v103
    %v107 = vpack.c.bf16 %v105, %v105
    %v108 = vld [vmem:[#allocation5] sm:$0xff]
    %v109 = vld [vmem:[#allocation5 + $0x8] sm:$0xff]
    %v110 = vld [vmem:[#allocation5 + $0x10] sm:$0xff]
    %v111 = vld [vmem:[#allocation5 + $0x18] sm:$0xff]
    %v112 = vld [vmem:[#allocation5 + $0x20] sm:$0xff]
    %v113 = vld [vmem:[#allocation5 + $0x28] sm:$0xff]
    %v114 = vld [vmem:[#allocation5 + $0x30] sm:$0xff]
    %v115 = vld [vmem:[#allocation5 + $0x38] sm:$0xff]
    %v116 = vld [vmem:[#allocation5 + $0x40] sm:$0xff]
    %v117 = vld [vmem:[#allocation5 + $0x48] sm:$0xff]
    %v118 = vld [vmem:[#allocation5 + $0x50] sm:$0xff]
    %v119 = vld [vmem:[#allocation5 + $0x58] sm:$0xff]
    %v120 = vld [vmem:[#allocation5 + $0x60] sm:$0xff]
    %v121 = vld [vmem:[#allocation5 + $0x68] sm:$0xff]
    %v122 = vld [vmem:[#allocation5 + $0x70] sm:$0xff]
    %v123 = vld [vmem:[#allocation5 + $0x78] sm:$0xff]
    %v124 = vld [vmem:[#allocation7] sm:$0x3]
    %v126 = vperm.slane %v124, 0
    %v127 = vperm.slane %v124, 1
    %v146 = vunpack.c.l.b16 %v108
    %v147 = vunpack.c.h.b16 %v108
    %v148 = vunpack.c.l.b16 %v109
    %v149 = vunpack.c.h.b16 %v109
    %v150 = vunpack.c.l.b16 %v110
    %v151 = vunpack.c.h.b16 %v110
    %v152 = vunpack.c.l.b16 %v111
    %v153 = vunpack.c.h.b16 %v111
    %v154 = vunpack.c.l.b16 %v112
    %v155 = vunpack.c.h.b16 %v112
    %v156 = vunpack.c.l.b16 %v113
    %v157 = vunpack.c.h.b16 %v113
    %v158 = vunpack.c.l.b16 %v114
    %v159 = vunpack.c.h.b16 %v114
    %v160 = vunpack.c.l.b16 %v115
    %v161 = vunpack.c.h.b16 %v115
    %v162 = vunpack.c.l.b16 %v116
    %v163 = vunpack.c.h.b16 %v116
    %v164 = vunpack.c.l.b16 %v117
    %v165 = vunpack.c.h.b16 %v117
    %v166 = vunpack.c.l.b16 %v118
    %v167 = vunpack.c.h.b16 %v118
    %v168 = vunpack.c.l.b16 %v119
    %v169 = vunpack.c.h.b16 %v119
    %v170 = vunpack.c.l.b16 %v120
    %v171 = vunpack.c.h.b16 %v120
    %v172 = vunpack.c.l.b16 %v121
    %v173 = vunpack.c.h.b16 %v121
    %v174 = vunpack.c.l.b16 %v122
    %v175 = vunpack.c.h.b16 %v122
    %v176 = vunpack.c.l.b16 %v123
    %v177 = vunpack.c.h.b16 %v123
    %v178 = vpack.c.b16 %v148, %v146
    %v179 = vpack.c.b16 %v149, %v147
    %v180 = vpack.c.b16 %v152, %v150
    %v181 = vpack.c.b16 %v153, %v151
    %v182 = vpack.c.b16 %v156, %v154
    %v183 = vpack.c.b16 %v157, %v155
    %v184 = vpack.c.b16 %v160, %v158
    %v185 = vpack.c.b16 %v161, %v159
    %v186 = vpack.c.b16 %v164, %v162
    %v187 = vpack.c.b16 %v165, %v163
    %v188 = vpack.c.b16 %v168, %v166
    %v189 = vpack.c.b16 %v169, %v167
    %v190 = vpack.c.b16 %v172, %v170
    %v191 = vpack.c.b16 %v173, %v171
    %v192 = vpack.c.b16 %v176, %v174
    %v193 = vpack.c.b16 %v177, %v175
    %210 = vmatpush.bf16.msra.mxu0 %v192
    %211 = vmatpush.bf16.msra.mxu0 %v190
    %212 = vmatpush.bf16.msra.mxu0 %v188
    %213 = vmatpush.bf16.msra.mxu0 %v186
    %214 = vmatpush.bf16.msra.mxu0 %v184
    %215 = vmatpush.bf16.msra.mxu0 %v182
    %216 = vmatpush.bf16.msra.mxu0 %v180
    %217 = vmatpush.bf16.msra.mxu0 %v178
    %218 = vmatmul.bf16.gmra.mxu0 %v106
    %v219 = vpop.f32.mrf.mxu0
    %v220 = vadd.f32 %v126, %v219
    %v221 = vpop.f32.mrf.mxu0
    %v222 = vadd.f32 %v126, %v221
    %223 = vmatmul.bf16.gmra.mxu0 %v107
    %v224 = vpop.f32.mrf.mxu0
    %v225 = vadd.f32 %v126, %v224
    %v226 = vpop.f32.mrf.mxu0
    %227 = vdwg.mxu0
    %228 = vmatpush.bf16.msra.mxu0 %v193
    %229 = vmatpush.bf16.msra.mxu0 %v191
    %230 = vmatpush.bf16.msra.mxu0 %v189
    %231 = vmatpush.bf16.msra.mxu0 %v187
    %232 = vmatpush.bf16.msra.mxu0 %v185
    %233 = vmatpush.bf16.msra.mxu0 %v183
    %234 = vmatpush.bf16.msra.mxu0 %v181
    %235 = vmatpush.bf16.msra.mxu0 %v179
    %236 = vmatmul.bf16.gmra.mxu0 %v106
    %v237 = vpop.f32.mrf.mxu0
    %v238 = vadd.f32 %v127, %v237
    %v239 = vpop.f32.mrf.mxu0
    %v240 = vadd.f32 %v127, %v239
    %241 = vmatmul.bf16.gmra.mxu0 %v107
    %v242 = vpop.f32.mrf.mxu0
    %v243 = vadd.f32 %v127, %v242
    %v244 = vpop.f32.mrf.mxu0
    %245 = vdwg.mxu0
    %v246 = vmax.f32 %v220, 0.0
    %v247 = vmax.f32 %v238, 0.0
    %v248 = vmax.f32 %v222, 0.0
    %v249 = vmax.f32 %v240, 0.0
    %v250 = vmax.f32 %v225, 0.0
    %v251 = vmax.f32 %v243, 0.0
    %v252 = vpack.c.bf16 %v248, %v246
    %v253 = vpack.c.bf16 %v249, %v247
    %v254 = vpack.c.bf16 %v250, %v250
    %v255 = vpack.c.bf16 %v251, %v251
    %v256 = vld [vmem:[#allocation8] sm:$0xff]
    %v257 = vld [vmem:[#allocation8 + $0x8] sm:$0xff]
    %v258 = vld [vmem:[#allocation8 + $0x10] sm:$0xff]
    %v259 = vld [vmem:[#allocation8 + $0x18] sm:$0xff]
    %v260 = vld [vmem:[#allocation8 + $0x20] sm:$0xff]
    %v261 = vld [vmem:[#allocation8 + $0x28] sm:$0xff]
    %v262 = vld [vmem:[#allocation8 + $0x30] sm:$0xff]
    %v263 = vld [vmem:[#allocation8 + $0x38] sm:$0xff]
    %v264 = vld [vmem:[#allocation8 + $0x40] sm:$0xff]
    %v265 = vld [vmem:[#allocation8 + $0x48] sm:$0xff]
    %v266 = vld [vmem:[#allocation8 + $0x50] sm:$0xff]
    %v267 = vld [vmem:[#allocation8 + $0x58] sm:$0xff]
    %v268 = vld [vmem:[#allocation8 + $0x60] sm:$0xff]
    %v269 = vld [vmem:[#allocation8 + $0x68] sm:$0xff]
    %v270 = vld [vmem:[#allocation8 + $0x70] sm:$0xff]
    %v271 = vld [vmem:[#allocation8 + $0x78] sm:$0xff]
    %v272 = vld [vmem:[#allocation8 + $0x80] sm:$0xff]
    %v273 = vld [vmem:[#allocation8 + $0x88] sm:$0xff]
    %v274 = vld [vmem:[#allocation8 + $0x90] sm:$0xff]
    %v275 = vld [vmem:[#allocation8 + $0x98] sm:$0xff]
    %v276 = vld [vmem:[#allocation8 + $0xa0] sm:$0xff]
    %v277 = vld [vmem:[#allocation8 + $0xa8] sm:$0xff]
    %v278 = vld [vmem:[#allocation8 + $0xb0] sm:$0xff]
    %v279 = vld [vmem:[#allocation8 + $0xb8] sm:$0xff]
    %v280 = vld [vmem:[#allocation8 + $0xc0] sm:$0xff]
    %v281 = vld [vmem:[#allocation8 + $0xc8] sm:$0xff]
    %v282 = vld [vmem:[#allocation8 + $0xd0] sm:$0xff]
    %v283 = vld [vmem:[#allocation8 + $0xd8] sm:$0xff]
    %v284 = vld [vmem:[#allocation8 + $0xe0] sm:$0xff]
    %v285 = vld [vmem:[#allocation8 + $0xe8] sm:$0xff]
    %v286 = vld [vmem:[#allocation8 + $0xf0] sm:$0xff]
    %v287 = vld [vmem:[#allocation8 + $0xf8] sm:$0xff]
    %v288 = vld [vmem:[%s4] sm:$0x3]
    %v290 = vperm.slane %v288, 0
    %v291 = vperm.slane %v288, 1
    %v326 = vunpack.c.l.b16 %v256
    %v327 = vunpack.c.h.b16 %v256
    %v328 = vunpack.c.l.b16 %v257
    %v329 = vunpack.c.h.b16 %v257
    %v330 = vunpack.c.l.b16 %v258
    %v331 = vunpack.c.h.b16 %v258
    %v332 = vunpack.c.l.b16 %v259
    %v333 = vunpack.c.h.b16 %v259
    %v334 = vunpack.c.l.b16 %v260
    %v335 = vunpack.c.h.b16 %v260
    %v336 = vunpack.c.l.b16 %v261
    %v337 = vunpack.c.h.b16 %v261
    %v338 = vunpack.c.l.b16 %v262
    %v339 = vunpack.c.h.b16 %v262
    %v340 = vunpack.c.l.b16 %v263
    %v341 = vunpack.c.h.b16 %v263
    %v342 = vunpack.c.l.b16 %v264
    %v343 = vunpack.c.h.b16 %v264
    %v344 = vunpack.c.l.b16 %v265
    %v345 = vunpack.c.h.b16 %v265
    %v346 = vunpack.c.l.b16 %v266
    %v347 = vunpack.c.h.b16 %v266
    %v348 = vunpack.c.l.b16 %v267
    %v349 = vunpack.c.h.b16 %v267
    %v350 = vunpack.c.l.b16 %v268
    %v351 = vunpack.c.h.b16 %v268
    %v352 = vunpack.c.l.b16 %v269
    %v353 = vunpack.c.h.b16 %v269
    %v354 = vunpack.c.l.b16 %v270
    %v355 = vunpack.c.h.b16 %v270
    %v356 = vunpack.c.l.b16 %v271
    %v357 = vunpack.c.h.b16 %v271
    %v358 = vunpack.c.l.b16 %v272
    %v359 = vunpack.c.h.b16 %v272
    %v360 = vunpack.c.l.b16 %v273
    %v361 = vunpack.c.h.b16 %v273
    %v362 = vunpack.c.l.b16 %v274
    %v363 = vunpack.c.h.b16 %v274
    %v364 = vunpack.c.l.b16 %v275
    %v365 = vunpack.c.h.b16 %v275
    %v366 = vunpack.c.l.b16 %v276
    %v367 = vunpack.c.h.b16 %v276
    %v368 = vunpack.c.l.b16 %v277
    %v369 = vunpack.c.h.b16 %v277
    %v370 = vunpack.c.l.b16 %v278
    %v371 = vunpack.c.h.b16 %v278
    %v372 = vunpack.c.l.b16 %v279
    %v373 = vunpack.c.h.b16 %v279
    %v374 = vunpack.c.l.b16 %v280
    %v375 = vunpack.c.h.b16 %v280
    %v376 = vunpack.c.l.b16 %v281
    %v377 = vunpack.c.h.b16 %v281
    %v378 = vunpack.c.l.b16 %v282
    %v379 = vunpack.c.h.b16 %v282
    %v380 = vunpack.c.l.b16 %v283
    %v381 = vunpack.c.h.b16 %v283
    %v382 = vunpack.c.l.b16 %v284
    %v383 = vunpack.c.h.b16 %v284
    %v384 = vunpack.c.l.b16 %v285
    %v385 = vunpack.c.h.b16 %v285
    %v386 = vunpack.c.l.b16 %v286
    %v387 = vunpack.c.h.b16 %v286
    %v388 = vunpack.c.l.b16 %v287
    %v389 = vunpack.c.h.b16 %v287
    %v390 = vpack.c.b16 %v328, %v326
    %v391 = vpack.c.b16 %v329, %v327
    %v392 = vpack.c.b16 %v332, %v330
    %v393 = vpack.c.b16 %v333, %v331
    %v394 = vpack.c.b16 %v336, %v334
    %v395 = vpack.c.b16 %v337, %v335
    %v396 = vpack.c.b16 %v340, %v338
    %v397 = vpack.c.b16 %v341, %v339
    %v398 = vpack.c.b16 %v344, %v342
    %v399 = vpack.c.b16 %v345, %v343
    %v400 = vpack.c.b16 %v348, %v346
    %v401 = vpack.c.b16 %v349, %v347
    %v402 = vpack.c.b16 %v352, %v350
    %v403 = vpack.c.b16 %v353, %v351
    %v404 = vpack.c.b16 %v356, %v354
    %v405 = vpack.c.b16 %v357, %v355
    %v406 = vpack.c.b16 %v360, %v358
    %v407 = vpack.c.b16 %v361, %v359
    %v408 = vpack.c.b16 %v364, %v362
    %v409 = vpack.c.b16 %v365, %v363
    %v410 = vpack.c.b16 %v368, %v366
    %v411 = vpack.c.b16 %v369, %v367
    %v412 = vpack.c.b16 %v372, %v370
    %v413 = vpack.c.b16 %v373, %v371
    %v414 = vpack.c.b16 %v376, %v374
    %v415 = vpack.c.b16 %v377, %v375
    %v416 = vpack.c.b16 %v380, %v378
    %v417 = vpack.c.b16 %v381, %v379
    %v418 = vpack.c.b16 %v384, %v382
    %v419 = vpack.c.b16 %v385, %v383
    %v420 = vpack.c.b16 %v388, %v386
    %v421 = vpack.c.b16 %v389, %v387
    %454 = vmatpush.bf16.msra.mxu0 %v404
    %455 = vmatpush.bf16.msra.mxu0 %v402
    %456 = vmatpush.bf16.msra.mxu0 %v400
    %457 = vmatpush.bf16.msra.mxu0 %v398
    %458 = vmatpush.bf16.msra.mxu0 %v396
    %459 = vmatpush.bf16.msra.mxu0 %v394
    %460 = vmatpush.bf16.msra.mxu0 %v392
    %461 = vmatpush.bf16.msra.mxu0 %v390
    %462 = vmatmul.bf16.gmra.mxu0 %v252
    %v463 = vpop.f32.mrf.mxu0
    %v464 = vadd.f32 %v290, %v463
    %v465 = vpop.f32.mrf.mxu0
    %v466 = vadd.f32 %v290, %v465
    %467 = vmatmul.bf16.gmra.mxu0 %v254
    %v468 = vpop.f32.mrf.mxu0
    %v469 = vadd.f32 %v290, %v468
    %v470 = vpop.f32.mrf.mxu0
    %471 = vdwg.mxu0
    %472 = vmatpush.bf16.msra.mxu0 %v420
    %473 = vmatpush.bf16.msra.mxu0 %v418
    %474 = vmatpush.bf16.msra.mxu0 %v416
    %475 = vmatpush.bf16.msra.mxu0 %v414
    %476 = vmatpush.bf16.msra.mxu0 %v412
    %477 = vmatpush.bf16.msra.mxu0 %v410
    %478 = vmatpush.bf16.msra.mxu0 %v408
    %479 = vmatpush.bf16.msra.mxu0 %v406
    %480 = vmatmul.bf16.gmra.mxu0 %v253
    %v481 = vpop.f32.mrf.mxu0
    %v482 = vadd.f32 %v464, %v481
    %v483 = vpop.f32.mrf.mxu0
    %v484 = vadd.f32 %v466, %v483
    %485 = vmatmul.bf16.gmra.mxu0 %v255
    %v486 = vpop.f32.mrf.mxu0
    %v487 = vadd.f32 %v469, %v486
    %v488 = vpop.f32.mrf.mxu0
    %489 = vdwg.mxu0
    %490 = vmatpush.bf16.msra.mxu0 %v405
    %491 = vmatpush.bf16.msra.mxu0 %v403
    %492 = vmatpush.bf16.msra.mxu0 %v401
    %493 = vmatpush.bf16.msra.mxu0 %v399
    %494 = vmatpush.bf16.msra.mxu0 %v397
    %495 = vmatpush.bf16.msra.mxu0 %v395
    %496 = vmatpush.bf16.msra.mxu0 %v393
    %497 = vmatpush.bf16.msra.mxu0 %v391
    %498 = vmatmul.bf16.gmra.mxu0 %v252
    %v499 = vpop.f32.mrf.mxu0
    %v500 = vadd.f32 %v291, %v499
    %v501 = vpop.f32.mrf.mxu0
    %v502 = vadd.f32 %v291, %v501
    %503 = vmatmul.bf16.gmra.mxu0 %v254
    %v504 = vpop.f32.mrf.mxu0
    %v505 = vadd.f32 %v291, %v504
    %v506 = vpop.f32.mrf.mxu0
    %507 = vdwg.mxu0
    %508 = vmatpush.bf16.msra.mxu0 %v421
    %509 = vmatpush.bf16.msra.mxu0 %v419
    %510 = vmatpush.bf16.msra.mxu0 %v417
    %511 = vmatpush.bf16.msra.mxu0 %v415
    %512 = vmatpush.bf16.msra.mxu0 %v413
    %513 = vmatpush.bf16.msra.mxu0 %v411
    %514 = vmatpush.bf16.msra.mxu0 %v409
    %515 = vmatpush.bf16.msra.mxu0 %v407
    %516 = vmatmul.bf16.gmra.mxu0 %v253
    %v517 = vpop.f32.mrf.mxu0
    %v518 = vadd.f32 %v500, %v517
    %v519 = vpop.f32.mrf.mxu0
    %v520 = vadd.f32 %v502, %v519
    %521 = vmatmul.bf16.gmra.mxu0 %v255
    %v522 = vpop.f32.mrf.mxu0
    %v523 = vadd.f32 %v505, %v522
    %v524 = vpop.f32.mrf.mxu0
    %525 = vdwg.mxu0
    %v526 = vmax.f32 %v482, 0.0
    %v527 = vmax.f32 %v518, 0.0
    %v528 = vmax.f32 %v484, 0.0
    %v529 = vmax.f32 %v520, 0.0
    %v530 = vmax.f32 %v487, 0.0
    %v531 = vmax.f32 %v523, 0.0
    %v532 = vpack.c.bf16 %v528, %v526
    %v533 = vpack.c.bf16 %v529, %v527
    %v534 = vpack.c.bf16 %v530, %v530
    %v535 = vpack.c.bf16 %v531, %v531
    %v536 = vld [vmem:[#allocation10] sm:$0xf]
    %v537 = vld [vmem:[#allocation10 + $0x4] sm:$0xf]
    %v538 = vld [vmem:[#allocation10 + $0x8] sm:$0xf]
    %v539 = vld [vmem:[#allocation10 + $0xc] sm:$0xf]
    %v540 = vld [vmem:[#allocation10 + $0x10] sm:$0xf]
    %v541 = vld [vmem:[#allocation10 + $0x14] sm:$0xf]
    %v542 = vld [vmem:[#allocation10 + $0x18] sm:$0xf]
    %v543 = vld [vmem:[#allocation10 + $0x1c] sm:$0xf]
    %v544 = vld [vmem:[#allocation10 + $0x20] sm:$0xf]
    %v545 = vld [vmem:[#allocation10 + $0x24] sm:$0xf]
    %v546 = vld [vmem:[#allocation10 + $0x28] sm:$0xf]
    %v547 = vld [vmem:[#allocation10 + $0x2c] sm:$0xf]
    %v548 = vld [vmem:[#allocation10 + $0x30] sm:$0xf]
    %v549 = vld [vmem:[#allocation10 + $0x34] sm:$0xf]
    %v550 = vld [vmem:[#allocation10 + $0x38] sm:$0xf]
    %v551 = vld [vmem:[#allocation10 + $0x3c] sm:$0xf]
    %v552 = vld [vmem:[#allocation10 + $0x40] sm:$0xf]
    %v553 = vld [vmem:[#allocation10 + $0x44] sm:$0xf]
    %v554 = vld [vmem:[#allocation10 + $0x48] sm:$0xf]
    %v555 = vld [vmem:[#allocation10 + $0x4c] sm:$0xf]
    %v556 = vld [vmem:[#allocation10 + $0x50] sm:$0xf]
    %v557 = vld [vmem:[#allocation10 + $0x54] sm:$0xf]
    %v558 = vld [vmem:[#allocation10 + $0x58] sm:$0xf]
    %v559 = vld [vmem:[#allocation10 + $0x5c] sm:$0xf]
    %v560 = vld [vmem:[#allocation10 + $0x60] sm:$0xf]
    %v561 = vld [vmem:[#allocation10 + $0x64] sm:$0xf]
    %v562 = vld [vmem:[#allocation10 + $0x68] sm:$0xf]
    %v563 = vld [vmem:[#allocation10 + $0x6c] sm:$0xf]
    %v564 = vld [vmem:[#allocation10 + $0x70] sm:$0xf]
    %v565 = vld [vmem:[#allocation10 + $0x74] sm:$0xf]
    %v566 = vld [vmem:[#allocation10 + $0x78] sm:$0xf]
    %v567 = vld [vmem:[#allocation10 + $0x7c] sm:$0xf]
    %v568 = vld [vmem:[%s6] sm:$0x1]
    %v570 = vperm.slane %v568, 0
    %v604 = vunpack.c.l.b16 %v536
    %v605 = vunpack.c.l.b16 %v537
    %v606 = vunpack.c.l.b16 %v538
    %v607 = vunpack.c.l.b16 %v539
    %v608 = vunpack.c.l.b16 %v540
    %v609 = vunpack.c.l.b16 %v541
    %v610 = vunpack.c.l.b16 %v542
    %v611 = vunpack.c.l.b16 %v543
    %v612 = vunpack.c.l.b16 %v544
    %v613 = vunpack.c.l.b16 %v545
    %v614 = vunpack.c.l.b16 %v546
    %v615 = vunpack.c.l.b16 %v547
    %v616 = vunpack.c.l.b16 %v548
    %v617 = vunpack.c.l.b16 %v549
    %v618 = vunpack.c.l.b16 %v550
    %v619 = vunpack.c.l.b16 %v551
    %v620 = vunpack.c.l.b16 %v552
    %v621 = vunpack.c.l.b16 %v553
    %v622 = vunpack.c.l.b16 %v554
    %v623 = vunpack.c.l.b16 %v555
    %v624 = vunpack.c.l.b16 %v556
    %v625 = vunpack.c.l.b16 %v557
    %v626 = vunpack.c.l.b16 %v558
    %v627 = vunpack.c.l.b16 %v559
    %v628 = vunpack.c.l.b16 %v560
    %v629 = vunpack.c.l.b16 %v561
    %v630 = vunpack.c.l.b16 %v562
    %v631 = vunpack.c.l.b16 %v563
    %v632 = vunpack.c.l.b16 %v564
    %v633 = vunpack.c.l.b16 %v565
    %v634 = vunpack.c.l.b16 %v566
    %v635 = vunpack.c.l.b16 %v567
    %v636 = vpack.c.b16 %v605, %v604
    %v637 = vpack.c.b16 %v607, %v606
    %v638 = vpack.c.b16 %v609, %v608
    %v639 = vpack.c.b16 %v611, %v610
    %v640 = vpack.c.b16 %v613, %v612
    %v641 = vpack.c.b16 %v615, %v614
    %v642 = vpack.c.b16 %v617, %v616
    %v643 = vpack.c.b16 %v619, %v618
    %v644 = vpack.c.b16 %v621, %v620
    %v645 = vpack.c.b16 %v623, %v622
    %v646 = vpack.c.b16 %v625, %v624
    %v647 = vpack.c.b16 %v627, %v626
    %v648 = vpack.c.b16 %v629, %v628
    %v649 = vpack.c.b16 %v631, %v630
    %v650 = vpack.c.b16 %v633, %v632
    %v651 = vpack.c.b16 %v635, %v634
    %668 = vmatpush.bf16.msra.mxu0 %v643
    %669 = vmatpush.bf16.msra.mxu0 %v642
    %670 = vmatpush.bf16.msra.mxu0 %v641
    %671 = vmatpush.bf16.msra.mxu0 %v640
    %672 = vmatpush.bf16.msra.mxu0 %v639
    %673 = vmatpush.bf16.msra.mxu0 %v638
    %674 = vmatpush.bf16.msra.mxu0 %v637
    %675 = vmatpush.bf16.msra.mxu0 %v636
    %676 = vmatmul.bf16.gmra.mxu0 %v532
    %v677 = vpop.f32.mrf.mxu0
    %v678 = vadd.f32 %v570, %v677
    %v679 = vpop.f32.mrf.mxu0
    %v680 = vadd.f32 %v570, %v679
    %681 = vmatmul.bf16.gmra.mxu0 %v534
    %v682 = vpop.f32.mrf.mxu0
    %v683 = vadd.f32 %v570, %v682
    %v684 = vpop.f32.mrf.mxu0
    %685 = vdwg.mxu0
    %686 = vmatpush.bf16.msra.mxu0 %v651
    %687 = vmatpush.bf16.msra.mxu0 %v650
    %688 = vmatpush.bf16.msra.mxu0 %v649
    %689 = vmatpush.bf16.msra.mxu0 %v648
    %690 = vmatpush.bf16.msra.mxu0 %v647
    %691 = vmatpush.bf16.msra.mxu0 %v646
    %692 = vmatpush.bf16.msra.mxu0 %v645
    %693 = vmatpush.bf16.msra.mxu0 %v644
    %694 = vmatmul.bf16.gmra.mxu0 %v533
    %v695 = vpop.f32.mrf.mxu0
    %v696 = vadd.f32 %v678, %v695
    %v697 = vpop.f32.mrf.mxu0
    %v698 = vadd.f32 %v680, %v697
    %699 = vmatmul.bf16.gmra.mxu0 %v535
    %v700 = vpop.f32.mrf.mxu0
    %v701 = vadd.f32 %v683, %v700
    %v702 = vpop.f32.mrf.mxu0
    %703 = vdwg.mxu0
    %v704 = vtanh.pop %v696
    %v705 = vtanh.pop %v698
    %v706 = vtanh.pop %v701
    %v707 = vpack.c.bf16 %v704, %v704
    %v708 = vpack.c.bf16 %v705, %v705
    %v709 = vpack.c.bf16 %v706, %v706
    %710 = vst [vmem:[#allocation11] sm:$0xf] %v707
    %711 = vst [vmem:[#allocation11 + $0x4] sm:$0xf] %v708
    %712 = vst [vmem:[#allocation11 + $0x8] sm:$0xf] %v709
    // Predicated region
    $region50: #{expression_net_forward.1} parent=1 // pred_check
      _
    $region51: #{expression_net_forward.1} parent=1 // pred_check_branch
      %714 = sbr.rel (0) target = $region53
    $region52: #{expression_net_forward.1} parent=1 // pred_region
      %716 = vsyncadd [#allocation4], 0
      %s717 = sshll.u32 [#allocation11], 4
      %s718 = int_to_ptr.vmem [resolvable:$true] %s717
      %s719 = sshll.u32 %s7, 4
      %s720 = int_to_ptr.hbm [resolvable:$true] %s719
      %725 = dma.vmem_to_hbm [thread:$0]  %s718, 192, %s720, [#allocation4], 64, 64, 4
    $region53: #{expression_net_forward.1} parent=1 // pred_fallthru
      _
    // Predicated region
    $region54: #{expression_net_forward.1} parent=1 // pred_check
      _
    $region55: #{expression_net_forward.1} parent=1 // pred_check_branch
      %727 = sbr.rel (0) target = $region57
    $region56: #{expression_net_forward.1} parent=1 // pred_region
      %729 = dma.done [#allocation4], 192
    $region57: #{expression_net_forward.1} parent=1 // pred_fallthru
      _
    %730 = vsyncpa [#allocation3], 1
    %731 = vsyncpa [#allocation6], 1
    %732 = vsyncpa [#allocation9], 1
    %733 = vsyncpa [#allocation4], 1

</llo_original>
